<compile_context>
chip_gen: v6e
topology: v6e:2x2x1
jax: 0.10.0
libtpu: 0.0.40
codegen_flags: <defaults>
</compile_context>

<pallas_src>
import functools

import jax
import jax.numpy as jnp
from jax.experimental import pallas as pl
from jax.experimental.pallas import tpu as pltpu


_LANE = 128      # last-dim alignment: dense vst + full MXU N/K
_SUBLANE = 8     # f32 sublane alignment for the row (second-minor) dim


def _round_up(x, m):
    return (x + m - 1) // m * m


def _vmem_cap_bytes():
    """Per-TensorCore VMEM capacity minus headroom (generation-aware)."""
    try:
        cap = int(pltpu.get_tpu_info().vmem_capacity_bytes)
    except Exception:
        cap = 64 << 20   # conservative fallback (v7x size) if query unavailable
    return max(cap - (8 << 20), 24 << 20)


def _make_mlp_kernel(n_sub, sub_rows):
    """Fused (x @ W1 + b1) -> GELU -> (@ W2) accumulate kernel.

    Grid: (M tiles [parallel], HID chunks [arbitrary]).
    n_sub independent row sub-tiles let the LLO scheduler overlap the erf-GELU
    VALU polynomial of one sub-tile with the MXU matmuls of the next.
    """

    def kernel(x_ref, w1_ref, b1_ref, w2_ref, b2_ref, o_ref, acc_ref):
        k = pl.program_id(1)

        @pl.when(k == 0)
        def _init():
            acc_ref[...] = jnp.zeros_like(acc_ref)

        w1 = w1_ref[...]
        w2 = w2_ref[...]
        b1 = b1_ref[...]                       # (1, thid) f32, broadcasts

        for s in range(n_sub):                 # static unroll
            r0 = s * sub_rows
            xs = x_ref[pl.ds(r0, sub_rows), :].astype(w1.dtype)
            # layer1 chunk: (rows, IN) @ (IN, thid), f32 accumulation on MXU
            h = jnp.dot(xs, w1, preferred_element_type=jnp.float32)
            h = h + b1
            # exact GELU: 0.5 * h * (1 + erf(h / sqrt(2)))  (torch default)
            h = 0.5 * h * (1.0 + jax.lax.erf(h * (1.0 / jnp.sqrt(2.0))))
            # layer2 chunk: (rows, thid) @ (thid, OUT) accumulated over chunks
            acc_ref[pl.ds(r0, sub_rows), :] += jnp.dot(
                h.astype(w2.dtype), w2, preferred_element_type=jnp.float32)

        @pl.when(k == pl.num_programs(1) - 1)
        def _store():
            o_ref[...] = (acc_ref[...] + b2_ref[...]).astype(o_ref.dtype)

    return kernel


def prepare_nonlinear_params(w1, b1, w2, b2, *, thid=512, use_bf16=False):
    """Pad weights/biases once, outside the hot path.

    Zero padding is exact: padded W/b columns are zero, GELU(0) = 0, and padded
    W2 rows are zero, so padded HID/IN/OUT features contribute nothing.
    Returns (padded params, meta dict with static out_dim / hid chunk width).
    """
    in_dim, hid = w1.shape
    out_dim = w2.shape[1]

    in_p = _round_up(in_dim, _LANE)
    thid_e = min(_round_up(thid, _LANE), _round_up(hid, _LANE))
    hid_p = _round_up(hid, thid_e)           # multiple of the chunk width
    out_p = _round_up(out_dim, _LANE)

    wdt = jnp.bfloat16 if use_bf16 else w1.dtype
    w1p = jnp.pad(w1, ((0, in_p - in_dim), (0, hid_p - hid))).astype(wdt)
    b1p = jnp.pad(b1.reshape(1, hid),
                  ((0, 0), (0, hid_p - hid))).astype(jnp.float32)
    w2p = jnp.pad(w2, ((0, hid_p - hid), (0, out_p - out_dim))).astype(wdt)
    b2p = jnp.pad(b2.reshape(1, out_dim),
                  ((0, 0), (0, out_p - out_dim))).astype(jnp.float32)

    return (w1p, b1p, w2p, b2p), dict(out_dim=out_dim, thid=thid_e)


@functools.partial(jax.jit, static_argnames=("out_dim", "thid", "tm"))
def nonlinear_forward(x, w1p, b1p, w2p, b2p, *, out_dim, thid, tm=512):
    """Apply Linear -> GELU -> Linear to x of shape (..., IN)."""
    orig_shape = x.shape
    in_dim = orig_shape[-1]
    in_p, hid_p = w1p.shape
    out_p = w2p.shape[1]

    x2d = x.reshape(-1, in_dim)
    m = x2d.shape[0]

    # Only pad x's feature dim if IN isn't lane-aligned (exact: padded W1 rows
    # are zero).  M is never padded; Pallas masks the final partial row block
    # and the partial OUT lanes, so no extra wrapper-side HBM pass is needed.
    if in_p != in_dim:
        x2d = jnp.pad(x2d, ((0, 0), (0, in_p - in_dim)))

    bpe_x = x2d.dtype.itemsize
    bpe_w = w1p.dtype.itemsize

    # Row tile: big enough to fill the MXU / amortize the ~0.35us per-step
    # overhead, split so v7x's two TensorCores both get work, and shrunk until
    # the footprint fits the generation-aware VMEM budget.
    cap = _vmem_cap_bytes()
    tm_eff = min(_round_up(tm, _SUBLANE), _round_up(m, _SUBLANE))
    if m >= 2 * _SUBLANE and pl.cdiv(m, tm_eff) < 2:
        tm_eff = _round_up(pl.cdiv(m, 2), _SUBLANE)

    def vmem_need(tm_e):
        return ((2 * tm_e * in_p) * bpe_x                                 # x stream
                + 2 * (in_p * thid + thid + thid * out_p + out_p) * bpe_w  # W chunks
                + (2 * tm_e * out_p) * bpe_x                              # out stream
                + tm_e * out_p * 4                                        # f32 acc
                + 2 * tm_e * thid * 4)                                    # h temps

    while vmem_need(tm_eff) > cap and tm_eff > 4 * _SUBLANE:
        tm_eff = _round_up(tm_eff // 2, _SUBLANE)
    # TODO(synk): if vmem_need still exceeds the cap here (extreme IN/OUT with
    # thid=512 on v7x), re-prepare the params with a smaller `thid`.

    # 2 independent row sub-tiles -> GELU VALU work overlaps MXU matmuls.
    n_sub = 2 if (tm_eff >= 2 * _SUBLANE and tm_eff % (2 * _SUBLANE) == 0) else 1
    sub_rows = tm_eff // n_sub

    grid = (pl.cdiv(m, tm_eff), hid_p // thid)

    cost = pl.CostEstimate(
        flops=2 * m * (in_p * hid_p + hid_p * out_p),
        transcendentals=0,   # erf lowers to a VPU polynomial on TPU
        bytes_accessed=(m * in_p * bpe_x + m * out_p * bpe_x
                        + grid[0] * (in_p * hid_p + hid_p * out_p) * bpe_w),
    )

    vmem_limit = int(min(cap, max(32 << 20, vmem_need(tm_eff) + (4 << 20))))

    out = pl.pallas_call(
        _make_mlp_kernel(n_sub, sub_rows),
        out_shape=jax.ShapeDtypeStruct((m, out_dim), x.dtype),
        grid=grid,
        in_specs=[
            pl.BlockSpec((tm_eff, in_p), lambda i, k: (i, 0)),   # x row tile
            pl.BlockSpec((in_p, thid), lambda i, k: (0, k)),     # W1 chunk
            pl.BlockSpec((1, thid), lambda i, k: (0, k)),        # b1 chunk
            pl.BlockSpec((thid, out_p), lambda i, k: (k, 0)),    # W2 chunk
            pl.BlockSpec((1, out_p), lambda i, k: (0, 0)),       # b2 (resident)
        ],
        out_specs=pl.BlockSpec((tm_eff, out_p), lambda i, k: (i, 0)),
        scratch_shapes=[pltpu.VMEM((tm_eff, out_p), jnp.float32)],
        compiler_params=pltpu.CompilerParams(
            dimension_semantics=("parallel", "arbitrary"),
            vmem_limit_bytes=vmem_limit,
        ),
        cost_estimate=cost,
    )(x2d, w1p, b1p, w2p, b2p)

    return out.reshape(*orig_shape[:-1], out_dim)


def init_nonlinear_params(key, input_size, output_size, hidden=None,
                          dtype=jnp.float32):
    """Deterministic init mirroring nn.Linear shapes (weights stored transposed)."""
    if hidden is None:
        hidden = input_size
    k1, k2, k3, k4 = jax.random.split(key, 4)
    lim1 = 1.0 / jnp.sqrt(input_size)
    lim2 = 1.0 / jnp.sqrt(hidden)
    w1 = jax.random.uniform(k1, (input_size, hidden), dtype, -lim1, lim1)
    b1 = jax.random.uniform(k2, (hidden,), dtype, -lim1, lim1)
    w2 = jax.random.uniform(k3, (hidden, output_size), dtype, -lim2, lim2)
    b2 = jax.random.uniform(k4, (output_size,), dtype, -lim2, lim2)
    return w1, b1, w2, b2


def _reference(x, w1, b1, w2, b2):
    h = x @ w1 + b1
    h = 0.5 * h * (1.0 + jax.lax.erf(h / jnp.sqrt(2.0)))
    return h @ w2 + b2


if __name__ == "__main__":
    key = jax.random.PRNGKey(0)
    kx, kp = jax.random.split(key)

    batch, seq, in_dim, hid, out_dim = 2, 8, 32, 32, 16
    x = jax.random.normal(kx, (batch, seq, in_dim), jnp.float32)
    w1, b1, w2, b2 = init_nonlinear_params(kp, in_dim, out_dim, hid)

    # Weights are padded once, outside the hot path.
    params, meta = prepare_nonlinear_params(w1, b1, w2, b2)

    y = nonlinear_forward(x, *params, out_dim=meta["out_dim"], thid=meta["thid"])
    y = jax.block_until_ready(y)

    y_ref = _reference(x.reshape(-1, in_dim), w1, b1, w2, b2).reshape(
        batch, seq, out_dim)
    assert y.shape == (batch, seq, out_dim)
    assert jnp.allclose(y, y_ref, atol=1e-5, rtol=1e-5)

    print("KERNEL_OK")
</pallas_src>

<mosaic_0001>
module attributes {stable_mosaic.version = 11 : i64} {
  func.func @kernel(%arg0: i32, %arg1: i32, %arg2: memref<8x128xf32, #tpu.memory_space<vmem>>, %arg3: memref<128x128xf32, #tpu.memory_space<vmem>>, %arg4: memref<1x128xf32, #tpu.memory_space<vmem>>, %arg5: memref<128x128xf32, #tpu.memory_space<vmem>>, %arg6: memref<1x128xf32, #tpu.memory_space<vmem>>, %arg7: memref<8x128xf32, #tpu.memory_space<vmem>>, %arg8: memref<8x128xf32, #tpu.memory_space<vmem>>) attributes {dimension_semantics = [#tpu.dimension_semantics<parallel>, #tpu.dimension_semantics<arbitrary>], iteration_bounds = array<i64: 2, 1>, scalar_prefetch = 0 : i64, scratch_operands = 1 : i64, tpu.core_type = #tpu.core_type<tc>, window_params = [{transform_indices = @transform_0, window_bounds = array<i64: 8, 128>}, {transform_indices = @transform_1, window_bounds = array<i64: 128, 128>}, {transform_indices = @transform_2, window_bounds = array<i64: 1, 128>}, {transform_indices = @transform_3, window_bounds = array<i64: 128, 128>}, {pipeline_mode = #tpu.pipeline_mode<synchronous>, transform_indices = @transform_4, window_bounds = array<i64: 1, 128>}, {transform_indices = @transform_5, window_bounds = array<i64: 8, 128>}]} {
    %c0_i32 = arith.constant 0 : i32
    %0 = arith.cmpi eq, %arg1, %c0_i32 : i32
    %1 = arith.extui %0 : i1 to i32
    %c0_i32_0 = arith.constant 0 : i32
    %2 = arith.cmpi ne, %1, %c0_i32_0 : i32
    scf.if %2 {
      %cst_19 = arith.constant 0.000000e+00 : f32
      %27 = vector.broadcast %cst_19 : f32 to vector<8x128xf32>
      %c0_20 = arith.constant 0 : index
      %c0_21 = arith.constant 0 : index
      %28 = vector.load %arg8[%c0_20, %c0_21] : memref<8x128xf32, #tpu.memory_space<vmem>>, vector<8x128xf32>
      tpu.vector_store %arg8[%c0_20, %c0_21], %27 {strides = array<i32>} : memref<8x128xf32, #tpu.memory_space<vmem>>, vector<8x128xf32>,
    } else {
    }
    %c0 = arith.constant 0 : index
    %c0_1 = arith.constant 0 : index
    %3 = vector.load %arg3[%c0, %c0_1] : memref<128x128xf32, #tpu.memory_space<vmem>>, vector<128x128xf32>
    %c0_2 = arith.constant 0 : index
    %c0_3 = arith.constant 0 : index
    %4 = vector.load %arg5[%c0_2, %c0_3] : memref<128x128xf32, #tpu.memory_space<vmem>>, vector<128x128xf32>
    %c0_4 = arith.constant 0 : index
    %c0_5 = arith.constant 0 : index
    %5 = vector.load %arg4[%c0_4, %c0_5] : memref<1x128xf32, #tpu.memory_space<vmem>>, vector<1x128xf32>
    %c0_6 = arith.constant 0 : index
    %c0_7 = arith.constant 0 : index
    %6 = vector.load %arg2[%c0_6, %c0_7] : memref<8x128xf32, #tpu.memory_space<vmem>>, vector<8x128xf32>
    %cst = arith.constant dense<0.000000e+00> : vector<8x128xf32>
    %7 = tpu.matmul %6, %3, %cst {dimension_numbers = #tpu.dot_dimension_numbers<[1], [0], [0], [1], [0, 0, 1, 1], [], []>} : vector<8x128xf32>, vector<128x128xf32>, vector<8x128xf32> -> vector<8x128xf32>
    %8 = vector.broadcast %5 : vector<1x128xf32> to vector<8x128xf32>
    %9 = arith.addf %7, %8 : vector<8x128xf32>
    %cst_8 = arith.constant 5.000000e-01 : f32
    %10 = vector.broadcast %cst_8 : f32 to vector<8x128xf32>
    %11 = arith.mulf %10, %9 : vector<8x128xf32>
    %cst_9 = arith.constant 2.000000e+00 : f32
    %12 = math.sqrt %cst_9 : f32
    %cst_10 = arith.constant 1.000000e+00 : f32
    %13 = arith.divf %cst_10, %12 : f32
    %14 = vector.broadcast %13 : f32 to vector<8x128xf32>
    %15 = arith.mulf %9, %14 : vector<8x128xf32>
    %16 = math.erf %15 : vector<8x128xf32>
    %cst_11 = arith.constant 1.000000e+00 : f32
    %17 = vector.broadcast %cst_11 : f32 to vector<8x128xf32>
    %18 = arith.addf %17, %16 : vector<8x128xf32>
    %19 = arith.mulf %11, %18 : vector<8x128xf32>
    %c0_12 = arith.constant 0 : index
    %c0_13 = arith.constant 0 : index
    %20 = vector.load %arg8[%c0_12, %c0_13] : memref<8x128xf32, #tpu.memory_space<vmem>>, vector<8x128xf32>
    %cst_14 = arith.constant dense<0.000000e+00> : vector<8x128xf32>
    %21 = tpu.matmul %19, %4, %cst_14 {dimension_numbers = #tpu.dot_dimension_numbers<[1], [0], [0], [1], [0, 0, 1, 1], [], []>} : vector<8x128xf32>, vector<128x128xf32>, vector<8x128xf32> -> vector<8x128xf32>
    %22 = arith.addf %20, %21 : vector<8x128xf32>
    %c0_15 = arith.constant 0 : index
    %c0_16 = arith.constant 0 : index
    %23 = vector.load %arg8[%c0_15, %c0_16] : memref<8x128xf32, #tpu.memory_space<vmem>>, vector<8x128xf32>
    tpu.vector_store %arg8[%c0_15, %c0_16], %22 {strides = array<i32>} : memref<8x128xf32, #tpu.memory_space<vmem>>, vector<8x128xf32>,
    %c0_i32_17 = arith.constant 0 : i32
    %24 = arith.cmpi eq, %arg1, %c0_i32_17 : i32
    %25 = arith.extui %24 : i1 to i32
    %c0_i32_18 = arith.constant 0 : i32
    %26 = arith.cmpi ne, %25, %c0_i32_18 : i32
    scf.if %26 {
      %c0_19 = arith.constant 0 : index
      %c0_20 = arith.constant 0 : index
      %27 = vector.load %arg8[%c0_19, %c0_20] : memref<8x128xf32, #tpu.memory_space<vmem>>, vector<8x128xf32>
      %c0_21 = arith.constant 0 : index
      %c0_22 = arith.constant 0 : index
      %28 = vector.load %arg6[%c0_21, %c0_22] : memref<1x128xf32, #tpu.memory_space<vmem>>, vector<1x128xf32>
      %29 = vector.broadcast %28 : vector<1x128xf32> to vector<8x128xf32>
      %30 = arith.addf %27, %29 : vector<8x128xf32>
      %c0_23 = arith.constant 0 : index
      %c0_24 = arith.constant 0 : index
      %31 = vector.load %arg7[%c0_23, %c0_24] : memref<8x128xf32, #tpu.memory_space<vmem>>, vector<8x128xf32>
      tpu.vector_store %arg7[%c0_23, %c0_24], %30 {strides = array<i32>} : memref<8x128xf32, #tpu.memory_space<vmem>>, vector<8x128xf32>,
    } else {
    }
    return
  }
  func.func @transform_0(%arg0: i32, %arg1: i32) -> (i32, i32) {
    %c0_i32 = arith.constant 0 : i32
    %c0_i32_0 = arith.constant 0 : i32
    return %arg0, %c0_i32 : i32, i32
  }
  func.func @transform_1(%arg0: i32, %arg1: i32) -> (i32, i32) {
    %c0_i32 = arith.constant 0 : i32
    %c0_i32_0 = arith.constant 0 : i32
    return %c0_i32, %arg1 : i32, i32
  }
  func.func @transform_2(%arg0: i32, %arg1: i32) -> (i32, i32) {
    %c0_i32 = arith.constant 0 : i32
    %c0_i32_0 = arith.constant 0 : i32
    return %c0_i32, %arg1 : i32, i32
  }
  func.func @transform_3(%arg0: i32, %arg1: i32) -> (i32, i32) {
    %c0_i32 = arith.constant 0 : i32
    %c0_i32_0 = arith.constant 0 : i32
    return %arg1, %c0_i32 : i32, i32
  }
  func.func @transform_4(%arg0: i32, %arg1: i32) -> (i32, i32) {
    %c0_i32 = arith.constant 0 : i32
    %c0_i32_0 = arith.constant 0 : i32
    %c0_i32_1 = arith.constant 0 : i32
    return %c0_i32, %c0_i32_0 : i32, i32
  }
  func.func @transform_5(%arg0: i32, %arg1: i32) -> (i32, i32) {
    %c0_i32 = arith.constant 0 : i32
    %c0_i32_0 = arith.constant 0 : i32
    return %arg0, %c0_i32 : i32, i32
  }
}

</mosaic_0001>

<llo_original>
// kernel: nonlinear_forward.1
$region0: #{nonlinear_forward.1}
  #allocation0 [shape = 'u32[]', space=smem, size = 0x4, offset = 0x4, fixed_abs, tag = 'smem constant byte address 0x4 - core index']
  #allocation1 [shape = 'u32[144,128]{1,0:T(1,128)}', space=vmem, size = 0x12000, scoped, tag = 'internal scratch']
  #allocation2 [shape = 'f32[8,128]{1,0:T(8,128)}', space=vmem, size = 0x1000, scoped, tag = 'scratch operand']
  %s0 = inlined_call_operand.vmem [shape: f32[16,128], index: 0, kind: input, shape index: {}]
  %s1 = inlined_call_operand.hbm [shape: f32[128,128], index: 1, kind: input, shape index: {}]
  %s2 = inlined_call_operand.vmem [shape: f32[1,128], index: 2, kind: input, shape index: {}]
  %s3 = inlined_call_operand.hbm [shape: f32[128,128], index: 3, kind: input, shape index: {}]
  %s4 = inlined_call_operand.vmem [shape: f32[1,128], index: 4, kind: input, shape index: {}]
  %s5 = inlined_call_operand.hbm [shape: f32[16,16], index: 5, kind: output, shape index: {}]
  %s6 = sld [smem:[#allocation0]]
  $region69: #{nonlinear_forward.1} parent=0
    _
  %s8 = ssub.s32 1, %s6
  %s9 = scalar_select 0, %s8, %s6
  $region1: #{nonlinear_forward.1} parent=0
    #allocation3 [shape = 'u8[65536]{0}', space=vmem, size = 0x10000, scoped, tag = 'input window, operand 1, single buffered']
    #allocation4 [shape = 's32[2]{0}', space=sflag, size = 0x8, scoped, tag = 'scoped memory for nonlinear_forward.1']
    #allocation5 [shape = 's32[2]{0}', space=sflag, size = 0x8, scoped, tag = 'scoped memory for nonlinear_forward.1']
    #allocation6 [shape = 'u8[65536]{0}', space=vmem, size = 0x10000, scoped, tag = 'input window, operand 3, single buffered']
    #allocation7 [shape = 's32[1]{0}', space=sflag, size = 0x4, scoped, tag = 'scoped memory for nonlinear_forward.1']
    #allocation8 [shape = 'u8[8192]{0}', space=vmem, size = 0x2000, scoped, tag = 'output window, operand 0']
    %10 = vsyncpa [#allocation4], 0
    %11 = vsyncpa [#allocation7], 0
    %12 = vsyncpa [#allocation5], 0
    %s13 = scalar_lea.sflag [#allocation5], 1
    %14 = vsyncpa %s13, 0
    loop: start=0, step=1, limit=4
    $region2: #{nonlinear_forward.1} parent=1 // loop_pre_header
      _
    $region3: #{nonlinear_forward.1} parent=1 // loop_header
      %s16 = sphi 0, %s20
      %p17 = scmp.ge.s32.totalorder %s16, 4
      %s23 = sphi 0, %s35
      %s24 = sphi 0, %s31
      %s25 = sphi 0, %s23
      %s26 = sphi 0, %s24
      %s27 = sphi 0, %s25
      %s28 = sphi 0, %s26
      %s38 = sphi 0, %s40
      %s41 = sphi 0, %s38
      %s42 = sphi 0, %s41
      %s58 = sphi 0, %s42
      %s64 = sphi 0, %s66
      %s67 = sphi 0, %s64
      %s68 = sphi 0, %s67
      %s84 = sphi 0, %s68
      %s90 = sphi 0, %s92
      %s93 = sphi 0, %s90
      %s94 = sphi 0, %s93
      %s110 = sphi 0, %s94
      %s116 = sphi 0, %s118
      %s119 = sphi 0, %s116
      %s120 = sphi 0, %s119
      %s136 = sphi 0, %s120
      %s140 = sphi 0, %s140
      %s142 = sphi 0, %s140
      %s143 = sphi 0, %s142
      %s157 = sphi 0, %s143
      %s163 = sphi 0, %s165
      %s166 = sphi 0, %s163
      %s167 = sphi 0, %s166
      %s183 = sphi 0, %s167
    $region4: #{nonlinear_forward.1} parent=1 // loop_header_branch
      %19 = sbr.rel (%p17) target = $region8
    $region5: #{nonlinear_forward.1} parent=1 // loop_body
      %s21 = ssub.s32 %s16, 1
      %s22 = ssub.s32 %s16, 2
      %s29 = sadd.s32 1, %s24
      %p30 = scmp.ge.s32.totalorder %s29, 1
      %s31 = scalar_select %p30, 0, %s29
      %s32 = sadd.s32 1, %s23
      %s33 = scalar_select %p30, %s32, %s23
      %p34 = scmp.ge.s32.totalorder %s33, 2
      %s35 = scalar_select %p34, 0, %s33
      %s36 = ssub.s32 %s23, %s35
      %p37 = scmp.eq.s32.totalorder %s36, 0
      %s39 = sadd.s32 %s38, 1
      %s40 = scalar_select %p37, %s38, %s39
      %p43 = pneg %p37
      %p44 = scmp.eq.s32.totalorder %s16, 1
      %p45 = por %p43, %p44
      %p46 = scmp.ne.s32.totalorder %s38, %s41
      %p47 = scmp.eq.s32.totalorder %s16, 0
      %p48 = por %p46, %p47
      %p49 = scmp.ne.s32.totalorder %s38, %s41
      %p50 = scmp.eq.s32.totalorder %s21, 1
      %p51 = por %p49, %p50
      %p52 = scmp.ne.s32.totalorder %s41, %s42
      %p53 = scmp.eq.s32.totalorder %s21, 0
      %p54 = por %p52, %p53
      %p55 = scmp.ne.s32.totalorder %s41, %s42
      %p56 = scmp.eq.s32.totalorder %s22, 1
      %p57 = por %p55, %p56
      %p59 = scmp.ne.s32.totalorder %s42, %s58
      %p60 = scmp.eq.s32.totalorder %s22, 0
      %p61 = por %p59, %p60
      %s62 = ssub.s32 %s24, %s31
      %p63 = scmp.eq.s32.totalorder %s62, 0
      %s65 = sadd.s32 %s64, 1
      %s66 = scalar_select %p63, %s64, %s65
      %p69 = pneg %p63
      %p70 = scmp.eq.s32.totalorder %s16, 1
      %p71 = por %p69, %p70
      %p72 = scmp.ne.s32.totalorder %s64, %s67
      %p73 = scmp.eq.s32.totalorder %s16, 0
      %p74 = por %p72, %p73
      %p75 = scmp.ne.s32.totalorder %s64, %s67
      %p76 = scmp.eq.s32.totalorder %s21, 1
      %p77 = por %p75, %p76
      %p78 = scmp.ne.s32.totalorder %s67, %s68
      %p79 = scmp.eq.s32.totalorder %s21, 0
      %p80 = por %p78, %p79
      %p81 = scmp.ne.s32.totalorder %s67, %s68
      %p82 = scmp.eq.s32.totalorder %s22, 1
      %p83 = por %p81, %p82
      %p85 = scmp.ne.s32.totalorder %s68, %s84
      %p86 = scmp.eq.s32.totalorder %s22, 0
      %p87 = por %p85, %p86
      %s88 = ssub.s32 %s24, %s31
      %p89 = scmp.eq.s32.totalorder %s88, 0
      %s91 = sadd.s32 %s90, 1
      %s92 = scalar_select %p89, %s90, %s91
      %p95 = pneg %p89
      %p96 = scmp.eq.s32.totalorder %s16, 1
      %p97 = por %p95, %p96
      %p98 = scmp.ne.s32.totalorder %s90, %s93
      %p99 = scmp.eq.s32.totalorder %s16, 0
      %p100 = por %p98, %p99
      %p101 = scmp.ne.s32.totalorder %s90, %s93
      %p102 = scmp.eq.s32.totalorder %s21, 1
      %p103 = por %p101, %p102
      %p104 = scmp.ne.s32.totalorder %s93, %s94
      %p105 = scmp.eq.s32.totalorder %s21, 0
      %p106 = por %p104, %p105
      %p107 = scmp.ne.s32.totalorder %s93, %s94
      %p108 = scmp.eq.s32.totalorder %s22, 1
      %p109 = por %p107, %p108
      %p111 = scmp.ne.s32.totalorder %s94, %s110
      %p112 = scmp.eq.s32.totalorder %s22, 0
      %p113 = por %p111, %p112
      %s114 = ssub.s32 %s24, %s31
      %p115 = scmp.eq.s32.totalorder %s114, 0
      %s117 = sadd.s32 %s116, 1
      %s118 = scalar_select %p115, %s116, %s117
      %p121 = pneg %p115
      %p122 = scmp.eq.s32.totalorder %s16, 1
      %p123 = por %p121, %p122
      %p124 = scmp.ne.s32.totalorder %s116, %s119
      %p125 = scmp.eq.s32.totalorder %s16, 0
      %p126 = por %p124, %p125
      %p127 = scmp.ne.s32.totalorder %s116, %s119
      %p128 = scmp.eq.s32.totalorder %s21, 1
      %p129 = por %p127, %p128
      %p130 = scmp.ne.s32.totalorder %s119, %s120
      %p131 = scmp.eq.s32.totalorder %s21, 0
      %p132 = por %p130, %p131
      %p133 = scmp.ne.s32.totalorder %s119, %s120
      %p134 = scmp.eq.s32.totalorder %s22, 1
      %p135 = por %p133, %p134
      %p137 = scmp.ne.s32.totalorder %s120, %s136
      %p138 = scmp.eq.s32.totalorder %s22, 0
      %p139 = por %p137, %p138
      %s141 = sadd.s32 %s140, 1
      %p144 = scmp.eq.s32.totalorder %s16, 1
      %p145 = scmp.ne.s32.totalorder %s140, %s142
      %p146 = scmp.eq.s32.totalorder %s16, 0
      %p147 = por %p145, %p146
      %p148 = scmp.ne.s32.totalorder %s140, %s142
      %p149 = scmp.eq.s32.totalorder %s21, 1
      %p150 = por %p148, %p149
      %p151 = scmp.ne.s32.totalorder %s142, %s143
      %p152 = scmp.eq.s32.totalorder %s21, 0
      %p153 = por %p151, %p152
      %p154 = scmp.ne.s32.totalorder %s142, %s143
      %p155 = scmp.eq.s32.totalorder %s22, 1
      %p156 = por %p154, %p155
      %p158 = scmp.ne.s32.totalorder %s143, %s157
      %p159 = scmp.eq.s32.totalorder %s22, 0
      %p160 = por %p158, %p159
      %s161 = ssub.s32 %s23, %s35
      %p162 = scmp.eq.s32.totalorder %s161, 0
      %s164 = sadd.s32 %s163, 1
      %s165 = scalar_select %p162, %s163, %s164
      %p168 = pneg %p162
      %p169 = scmp.eq.s32.totalorder %s16, 1
      %p170 = por %p168, %p169
      %p171 = scmp.ne.s32.totalorder %s163, %s166
      %p172 = scmp.eq.s32.totalorder %s16, 0
      %p173 = por %p171, %p172
      %p174 = scmp.ne.s32.totalorder %s163, %s166
      %p175 = scmp.eq.s32.totalorder %s21, 1
      %p176 = por %p174, %p175
      %p177 = scmp.ne.s32.totalorder %s166, %s167
      %p178 = scmp.eq.s32.totalorder %s21, 0
      %p179 = por %p177, %p178
      %p180 = scmp.ne.s32.totalorder %s166, %s167
      %p181 = scmp.eq.s32.totalorder %s22, 1
      %p182 = por %p180, %p181
      %p184 = scmp.ne.s32.totalorder %s167, %s183
      %p185 = scmp.eq.s32.totalorder %s22, 0
      %p186 = por %p184, %p185
      %p187 = scmp.le.s32.totalorder 1, %s16
      %p188 = scmp.lt.s32.totalorder %s16, 3
      %p189 = pnand %p187, %p188
      %p190 = pneg %p189
      // Predicated region
      $region9: #{nonlinear_forward.1} parent=5 // pred_check
        _
      $region10: #{nonlinear_forward.1} parent=5 // pred_check_branch
        %192 = sbr.rel (%p189) target = $region12
      $region11: #{nonlinear_forward.1} parent=5 // pred_region
        %s193 = ssub.s32 %s16, 1
        // Predicated region
        $region13: #{nonlinear_forward.1} parent=11 // pred_check
          %p194 = pneg %p80
        $region14: #{nonlinear_forward.1} parent=11 // pred_check_branch
          %196 = sbr.rel (%p194) target = $region16
        $region15: #{nonlinear_forward.1} parent=11 // pred_region
          %s198 = ssub.s32 2048, 2048
          %199 = vsyncadd [#allocation4], %s198
          %s200 = smul.addr %s26, 128
          %s201 = scalar_lea.hbm %s1, %s200
          %s202 = sshll.u32 [#allocation3], 4
          %s203 = int_to_ptr.vmem [resolvable:$true] %s202
          %208 = dma.hbm_to_vmem [thread:$0]  %s201, 2048, %s203, [#allocation4], 128, 128, 8
        $region16: #{nonlinear_forward.1} parent=11 // pred_fallthru
          _
        // Predicated region
        $region17: #{nonlinear_forward.1} parent=11 // pred_check
          %p209 = pneg %p106
        $region18: #{nonlinear_forward.1} parent=11 // pred_check_branch
          %211 = sbr.rel (%p209) target = $region20
        $region19: #{nonlinear_forward.1} parent=11 // pred_region
          %p212 = scmp.lt.s32.totalorder %s26, 0
          %s213 = scalar_select %p212, %s26, 0
          %s214 = scalar_lea.vmem %s2, %s213
        $region20: #{nonlinear_forward.1} parent=11 // pred_fallthru
          _
        // Predicated region
        $region21: #{nonlinear_forward.1} parent=11 // pred_check
          %p215 = pneg %p132
        $region22: #{nonlinear_forward.1} parent=11 // pred_check_branch
          %217 = sbr.rel (%p215) target = $region24
        $region23: #{nonlinear_forward.1} parent=11 // pred_region
          %s218 = smul.u32 16, %s26
          %s220 = ssub.s32 2048, 2048
          %221 = vsyncadd [#allocation7], %s220
          %s222 = smul.addr %s218, 128
          %s223 = scalar_lea.hbm %s3, %s222
          %s224 = sshll.u32 [#allocation6], 4
          %s225 = int_to_ptr.vmem [resolvable:$true] %s224
          %230 = dma.hbm_to_vmem [thread:$0]  %s223, 2048, %s225, [#allocation7], 128, 128, 8
        $region24: #{nonlinear_forward.1} parent=11 // pred_fallthru
          _
        // Predicated region
        $region25: #{nonlinear_forward.1} parent=11 // pred_check
          %p231 = pneg %p153
        $region26: #{nonlinear_forward.1} parent=11 // pred_check_branch
          %233 = sbr.rel (%p231) target = $region28
        $region27: #{nonlinear_forward.1} parent=11 // pred_region
          _
        $region28: #{nonlinear_forward.1} parent=11 // pred_fallthru
          _
      $region12: #{nonlinear_forward.1} parent=5 // pred_fallthru
        _
      %p234 = scmp.lt.s32.totalorder %s16, 2
      // Predicated region
      $region29: #{nonlinear_forward.1} parent=5 // pred_check
        %p235 = pneg %p234
      $region30: #{nonlinear_forward.1} parent=5 // pred_check_branch
        %237 = sbr.rel (%p235) target = $region32
      $region31: #{nonlinear_forward.1} parent=5 // pred_region
        // Predicated region
        $region33: #{nonlinear_forward.1} parent=31 // pred_check
          %p238 = pneg %p48
        $region34: #{nonlinear_forward.1} parent=31 // pred_check_branch
          %240 = sbr.rel (%p238) target = $region36
        $region35: #{nonlinear_forward.1} parent=31 // pred_region
          %p241 = scmp.lt.s32.totalorder %s23, 1
          %s242 = scalar_select %p241, %s23, 1
          %s243 = smul.addr %s242, 8
          %s244 = scalar_lea.vmem %s0, %s243
        $region36: #{nonlinear_forward.1} parent=31 // pred_fallthru
          _
      $region32: #{nonlinear_forward.1} parent=5 // pred_fallthru
        _
      %p245 = scmp.le.s32.totalorder 1, %s16
      %p246 = scmp.lt.s32.totalorder %s16, 3
      %p247 = pnand %p245, %p246
      %p248 = pneg %p247
      // Predicated region
      $region37: #{nonlinear_forward.1} parent=5 // pred_check
        _
      $region38: #{nonlinear_forward.1} parent=5 // pred_check_branch
        %250 = sbr.rel (%p247) target = $region40
      $region39: #{nonlinear_forward.1} parent=5 // pred_region
        %s251 = ssub.s32 %s16, 1
        // Predicated region
        $region41: #{nonlinear_forward.1} parent=39 // pred_check
          %p252 = pneg %p80
        $region42: #{nonlinear_forward.1} parent=39 // pred_check_branch
          %254 = sbr.rel (%p252) target = $region44
        $region43: #{nonlinear_forward.1} parent=39 // pred_region
          %255 = dma.done [#allocation4], 2048
        $region44: #{nonlinear_forward.1} parent=39 // pred_fallthru
          _
        // Predicated region
        $region45: #{nonlinear_forward.1} parent=39 // pred_check
          %p256 = pneg %p132
        $region46: #{nonlinear_forward.1} parent=39 // pred_check_branch
          %258 = sbr.rel (%p256) target = $region48
        $region47: #{nonlinear_forward.1} parent=39 // pred_region
          %259 = dma.done [#allocation7], 2048
        $region48: #{nonlinear_forward.1} parent=39 // pred_fallthru
          _
        %p260 = scmp.lt.s32.totalorder %s25, 1
        %s261 = scalar_select %p260, %s25, 1
        %s262 = smul.addr %s261, 8
        %s263 = scalar_lea.vmem %s0, %s262
        %p264 = pneg %p54
        %p265 = pneg %p51
        %p266 = pneg %p80
        %p267 = pneg %p77
        %p268 = scmp.lt.s32.totalorder %s26, 0
        %s269 = scalar_select %p268, %s26, 0
        %s270 = scalar_lea.vmem %s2, %s269
        %p271 = pneg %p106
        %p272 = pneg %p103
        %p273 = pneg %p132
        %p274 = pneg %p129
        %p275 = pneg %p153
        %p276 = pneg %p150
        %p277 = pneg %p179
        %p278 = pneg %p176
        %s279 = sand.u32 %s166, 1
        %s280 = scalar_lea.sflag [#allocation5], %s279
        %s281 = sand.u32 %s166, 1
        %s282 = smul.addr %s281, 8
        %s283 = scalar_lea.vmem [#allocation8], %s282
        %p284 = scmp.lt.s32.totalorder %s25, 1
        %s285 = scalar_select %p284, %s25, 1
        %s286 = smul.addr %s285, 8
        %s287 = scalar_lea.vmem %s0, %s286
        %p288 = scmp.lt.s32.totalorder %s26, 0
        %s289 = scalar_select %p288, %s26, 0
        %s290 = scalar_lea.vmem %s2, %s289
        %s291 = smul.u32 16, %s26
        %p292 = scmp.eq.s32.totalorder %s26, 0
        // Predicated region
        $region49: #{nonlinear_forward.1} parent=39 // pred_check
          %p293 = pneg %p292
        $region50: #{nonlinear_forward.1} parent=39 // pred_check_branch
          %295 = sbr.rel (%p293) target = $region52
        $region51: #{nonlinear_forward.1} parent=39 // pred_region
          %296 = vst [vmem:[#allocation2] sm:$0xff] 0.0
        $region52: #{nonlinear_forward.1} parent=39 // pred_fallthru
          _
        %v297 = vld [vmem:[#allocation3] sm:$0xff]
        %v298 = vld [vmem:[#allocation3 + $0x8] sm:$0xff]
        %v299 = vld [vmem:[#allocation3 + $0x10] sm:$0xff]
        %v300 = vld [vmem:[#allocation3 + $0x18] sm:$0xff]
        %v301 = vld [vmem:[#allocation3 + $0x20] sm:$0xff]
        %v302 = vld [vmem:[#allocation3 + $0x28] sm:$0xff]
        %v303 = vld [vmem:[#allocation3 + $0x30] sm:$0xff]
        %v304 = vld [vmem:[#allocation3 + $0x38] sm:$0xff]
        %v305 = vld [vmem:[#allocation3 + $0x40] sm:$0xff]
        %v306 = vld [vmem:[#allocation3 + $0x48] sm:$0xff]
        %v307 = vld [vmem:[#allocation3 + $0x50] sm:$0xff]
        %v308 = vld [vmem:[#allocation3 + $0x58] sm:$0xff]
        %v309 = vld [vmem:[#allocation3 + $0x60] sm:$0xff]
        %v310 = vld [vmem:[#allocation3 + $0x68] sm:$0xff]
        %v311 = vld [vmem:[#allocation3 + $0x70] sm:$0xff]
        %v312 = vld [vmem:[#allocation3 + $0x78] sm:$0xff]
        %v313 = vld [vmem:[#allocation6] sm:$0xff]
        %v314 = vld [vmem:[#allocation6 + $0x8] sm:$0xff]
        %v315 = vld [vmem:[#allocation6 + $0x10] sm:$0xff]
        %v316 = vld [vmem:[#allocation6 + $0x18] sm:$0xff]
        %v317 = vld [vmem:[#allocation6 + $0x20] sm:$0xff]
        %v318 = vld [vmem:[#allocation6 + $0x28] sm:$0xff]
        %v319 = vld [vmem:[#allocation6 + $0x30] sm:$0xff]
        %v320 = vld [vmem:[#allocation6 + $0x38] sm:$0xff]
        %v321 = vld [vmem:[#allocation6 + $0x40] sm:$0xff]
        %v322 = vld [vmem:[#allocation6 + $0x48] sm:$0xff]
        %v323 = vld [vmem:[#allocation6 + $0x50] sm:$0xff]
        %v324 = vld [vmem:[#allocation6 + $0x58] sm:$0xff]
        %v325 = vld [vmem:[#allocation6 + $0x60] sm:$0xff]
        %v326 = vld [vmem:[#allocation6 + $0x68] sm:$0xff]
        %v327 = vld [vmem:[#allocation6 + $0x70] sm:$0xff]
        %v328 = vld [vmem:[#allocation6 + $0x78] sm:$0xff]
        %v329 = vld [vmem:[%s290] sm:$0x1]
        %v330 = vld [vmem:[%s287] sm:$0xff]
        %v332 = vlaneseq
        %v333 = vshrl.u32 %v332, 7
        %v334 = vsub.s32 0, %v333
        %v335 = vrot.slane %v329, %v334
        %337 = vmatprep.subr.mxu0 0.0
        %338 = vmatpush1.msra.mxu0 %v312
        %339 = vmatprep.subr.mxu0 0.0
        %340 = vmatpush1.msra.mxu0 %v311
        %341 = vmatprep.subr.mxu0 0.0
        %342 = vmatpush1.msra.mxu0 %v310
        %343 = vmatprep.subr.mxu0 0.0
        %344 = vmatpush1.msra.mxu0 %v309
        %345 = vmatprep.subr.mxu0 0.0
        %346 = vmatpush1.msra.mxu0 %v308
        %347 = vmatprep.subr.mxu0 0.0
        %348 = vmatpush1.msra.mxu0 %v307
        %349 = vmatprep.subr.mxu0 0.0
        %350 = vmatpush1.msra.mxu0 %v306
        %351 = vmatprep.subr.mxu0 0.0
        %352 = vmatpush1.msra.mxu0 %v305
        %353 = vmatprep.subr.mxu0 0.0
        %354 = vmatpush1.msra.mxu0 %v304
        %355 = vmatprep.subr.mxu0 0.0
        %356 = vmatpush1.msra.mxu0 %v303
        %357 = vmatprep.subr.mxu0 0.0
        %358 = vmatpush1.msra.mxu0 %v302
        %359 = vmatprep.subr.mxu0 0.0
        %360 = vmatpush1.msra.mxu0 %v301
        %361 = vmatprep.subr.mxu0 0.0
        %362 = vmatpush1.msra.mxu0 %v300
        %363 = vmatprep.subr.mxu0 0.0
        %364 = vmatpush1.msra.mxu0 %v299
        %365 = vmatprep.subr.mxu0 0.0
        %366 = vmatpush1.msra.mxu0 %v298
        %367 = vmatprep.subr.mxu0 0.0
        %368 = vmatpush1.msra.mxu0 %v297
        %369 = vmatprep.subr.mxu0 0.0
        %370 = vmatpush2.msra.mxu0 0.0
        %371 = vmatprep.subr.mxu0 0.0
        %372 = vmatpush2.msra.mxu0 0.0
        %373 = vmatprep.subr.mxu0 0.0
        %374 = vmatpush2.msra.mxu0 0.0
        %375 = vmatprep.subr.mxu0 0.0
        %376 = vmatpush2.msra.mxu0 0.0
        %377 = vmatprep.subr.mxu0 0.0
        %378 = vmatpush2.msra.mxu0 0.0
        %379 = vmatprep.subr.mxu0 0.0
        %380 = vmatpush2.msra.mxu0 0.0
        %381 = vmatprep.subr.mxu0 0.0
        %382 = vmatpush2.msra.mxu0 0.0
        %383 = vmatprep.subr.mxu0 0.0
        %384 = vmatpush2.msra.mxu0 0.0
        %385 = vmatprep.subr.mxu0 0.0
        %386 = vmatpush2.msra.mxu0 0.0
        %387 = vmatprep.subr.mxu0 0.0
        %388 = vmatpush2.msra.mxu0 0.0
        %389 = vmatprep.subr.mxu0 0.0
        %390 = vmatpush2.msra.mxu0 0.0
        %391 = vmatprep.subr.mxu0 0.0
        %392 = vmatpush2.msra.mxu0 0.0
        %393 = vmatprep.subr.mxu0 0.0
        %394 = vmatpush2.msra.mxu0 0.0
        %395 = vmatprep.subr.mxu0 0.0
        %396 = vmatpush2.msra.mxu0 0.0
        %397 = vmatprep.subr.mxu0 0.0
        %398 = vmatpush2.msra.mxu0 0.0
        %399 = vmatprep.subr.mxu0 0.0
        %400 = vmatpush2.msra.mxu0 0.0
        %401 = vmatprep.mubr.f32.mxu0 0.0
        %402 = vmatmul.mubr.f32.gmra.mxu0 %v330
        %v403 = vpop.f32.mrf.mxu0
        %v404 = vadd.f32 %v335, %v403
        %v405 = vpop.f32.mrf.mxu0
        %406 = vdwg.mxu0
        %v407 = vmul.f32 %v404, 0.5
        %v408 = vmul.f32 %v404, 0.70710677
        %v409 = verf.f32.pop %v408
        %v410 = vadd.f32 %v409, 1.0
        %v411 = vmul.f32 %v407, %v410
        %v412 = vld [vmem:[#allocation2] sm:$0xff]
        %413 = vmatprep.subr.mxu0 0.0
        %414 = vmatpush1.msra.mxu0 %v328
        %415 = vmatprep.subr.mxu0 0.0
        %416 = vmatpush1.msra.mxu0 %v327
        %417 = vmatprep.subr.mxu0 0.0
        %418 = vmatpush1.msra.mxu0 %v326
        %419 = vmatprep.subr.mxu0 0.0
        %420 = vmatpush1.msra.mxu0 %v325
        %421 = vmatprep.subr.mxu0 0.0
        %422 = vmatpush1.msra.mxu0 %v324
        %423 = vmatprep.subr.mxu0 0.0
        %424 = vmatpush1.msra.mxu0 %v323
        %425 = vmatprep.subr.mxu0 0.0
        %426 = vmatpush1.msra.mxu0 %v322
        %427 = vmatprep.subr.mxu0 0.0
        %428 = vmatpush1.msra.mxu0 %v321
        %429 = vmatprep.subr.mxu0 0.0
        %430 = vmatpush1.msra.mxu0 %v320
        %431 = vmatprep.subr.mxu0 0.0
        %432 = vmatpush1.msra.mxu0 %v319
        %433 = vmatprep.subr.mxu0 0.0
        %434 = vmatpush1.msra.mxu0 %v318
        %435 = vmatprep.subr.mxu0 0.0
        %436 = vmatpush1.msra.mxu0 %v317
        %437 = vmatprep.subr.mxu0 0.0
        %438 = vmatpush1.msra.mxu0 %v316
        %439 = vmatprep.subr.mxu0 0.0
        %440 = vmatpush1.msra.mxu0 %v315
        %441 = vmatprep.subr.mxu0 0.0
        %442 = vmatpush1.msra.mxu0 %v314
        %443 = vmatprep.subr.mxu0 0.0
        %444 = vmatpush1.msra.mxu0 %v313
        %445 = vmatprep.subr.mxu0 0.0
        %446 = vmatpush2.msra.mxu0 0.0
        %447 = vmatprep.subr.mxu0 0.0
        %448 = vmatpush2.msra.mxu0 0.0
        %449 = vmatprep.subr.mxu0 0.0
        %450 = vmatpush2.msra.mxu0 0.0
        %451 = vmatprep.subr.mxu0 0.0
        %452 = vmatpush2.msra.mxu0 0.0
        %453 = vmatprep.subr.mxu0 0.0
        %454 = vmatpush2.msra.mxu0 0.0
        %455 = vmatprep.subr.mxu0 0.0
        %456 = vmatpush2.msra.mxu0 0.0
        %457 = vmatprep.subr.mxu0 0.0
        %458 = vmatpush2.msra.mxu0 0.0
        %459 = vmatprep.subr.mxu0 0.0
        %460 = vmatpush2.msra.mxu0 0.0
        %461 = vmatprep.subr.mxu0 0.0
        %462 = vmatpush2.msra.mxu0 0.0
        %463 = vmatprep.subr.mxu0 0.0
        %464 = vmatpush2.msra.mxu0 0.0
        %465 = vmatprep.subr.mxu0 0.0
        %466 = vmatpush2.msra.mxu0 0.0
        %467 = vmatprep.subr.mxu0 0.0
        %468 = vmatpush2.msra.mxu0 0.0
        %469 = vmatprep.subr.mxu0 0.0
        %470 = vmatpush2.msra.mxu0 0.0
        %471 = vmatprep.subr.mxu0 0.0
        %472 = vmatpush2.msra.mxu0 0.0
        %473 = vmatprep.subr.mxu0 0.0
        %474 = vmatpush2.msra.mxu0 0.0
        %475 = vmatprep.subr.mxu0 0.0
        %476 = vmatpush2.msra.mxu0 0.0
        %477 = vmatprep.mubr.f32.mxu0 0.0
        %478 = vmatmul.mubr.f32.gmra.mxu0 %v411
        %v479 = vpop.f32.mrf.mxu0
        %v480 = vadd.f32 0.0, %v479
        %v481 = vpop.f32.mrf.mxu0
        %482 = vdwg.mxu0
        %v483 = vadd.f32 %v412, %v480
        %484 = vst [vmem:[#allocation2] sm:$0xff] %v483
        // Predicated region
        $region53: #{nonlinear_forward.1} parent=39 // pred_check
          %p485 = pneg %p292
        $region54: #{nonlinear_forward.1} parent=39 // pred_check_branch
          %487 = sbr.rel (%p485) target = $region56
        $region55: #{nonlinear_forward.1} parent=39 // pred_region
          %v488 = vld [vmem:[#allocation2] sm:$0xff]
          %v489 = vld [vmem:[%s4] sm:$0x1]
          %v491 = vlaneseq
          %v492 = vshrl.u32 %v491, 7
          %v493 = vsub.s32 0, %v492
          %v494 = vrot.slane %v489, %v493
          %v496 = vadd.f32 %v488, %v494
          %497 = vst [vmem:[%s283] sm:$0xff] %v496
        $region56: #{nonlinear_forward.1} parent=39 // pred_fallthru
          _
        %s498 = sand.u32 %s166, 1
        %s499 = scalar_lea.sflag [#allocation5], %s498
        %s500 = sand.u32 %s166, 1
        %s501 = smul.addr %s500, 8
        %s502 = scalar_lea.vmem [#allocation8], %s501
        // Predicated region
        $region57: #{nonlinear_forward.1} parent=39 // pred_check
          %p503 = pneg %p176
        $region58: #{nonlinear_forward.1} parent=39 // pred_check_branch
          %505 = sbr.rel (%p503) target = $region60
        $region59: #{nonlinear_forward.1} parent=39 // pred_region
          %s507 = ssub.s32 128, 128
          %508 = vsyncadd %s499, %s507
          %s509 = smul.addr %s25, 128
          %s510 = scalar_lea.hbm %s5, %s509
          %s512 = sshll.u32 %s502, 4
          %s513 = int_to_ptr.vmem [resolvable:$true] %s512
          %515 = dma.vmem_to_hbm [thread:$0]  %s513, 128, %s510, %s499
        $region60: #{nonlinear_forward.1} parent=39 // pred_fallthru
          _
      $region40: #{nonlinear_forward.1} parent=5 // pred_fallthru
        _
      %p516 = scmp.le.s32.totalorder 2, %s16
      // Predicated region
      $region61: #{nonlinear_forward.1} parent=5 // pred_check
        %p517 = pneg %p516
      $region62: #{nonlinear_forward.1} parent=5 // pred_check_branch
        %519 = sbr.rel (%p517) target = $region64
      $region63: #{nonlinear_forward.1} parent=5 // pred_region
        %s520 = ssub.s32 %s16, 2
        // Predicated region
        $region65: #{nonlinear_forward.1} parent=63 // pred_check
          %p521 = pneg %p182
        $region66: #{nonlinear_forward.1} parent=63 // pred_check_branch
          %523 = sbr.rel (%p521) target = $region68
        $region67: #{nonlinear_forward.1} parent=63 // pred_region
          %s524 = sand.u32 %s167, 1
          %s525 = scalar_lea.sflag [#allocation5], %s524
          %s526 = sand.u32 %s167, 1
          %s527 = smul.addr %s526, 8
          %s528 = scalar_lea.vmem [#allocation8], %s527
          %529 = dma.done %s525, 128
        $region68: #{nonlinear_forward.1} parent=63 // pred_fallthru
          _
      $region64: #{nonlinear_forward.1} parent=5 // pred_fallthru
        _
    $region6: #{nonlinear_forward.1} parent=1 // loop_footer
      %s20 = sadd.s32 1, %s16
    $region7: #{nonlinear_forward.1} parent=1 // loop_footer_branch
      %15 = sbr.rel target = $region3
    $region8: #{nonlinear_forward.1} parent=1 // loop_exit
      _
    %530 = vsyncpa [#allocation4], 1
    %s531 = scalar_lea.sflag [#allocation4], 1
    %532 = vsyncpa %s531, 1
    %533 = vsyncpa [#allocation7], 1
    %534 = vsyncpa [#allocation5], 1
    %s535 = scalar_lea.sflag [#allocation5], 1
    %536 = vsyncpa %s535, 1

</llo_original>
